<compile_context>
chip_gen: v7x
topology: tpu7x:2x2x1
jax: 0.10.0
libtpu: 0.0.40
codegen_flags: <defaults>
</compile_context>

<pallas_src>
import functools

import jax
import jax.numpy as jnp
from jax import lax
from jax.experimental import pallas as pl
from jax.experimental.pallas import tpu as pltpu


def _hloss_kernel(x_ref, o_ref, m_sc, se_sc, ses_sc, *, n_cols, col_tile, col_masked):
    """Online-softmax negative-entropy rows: processes one (TB, TC) tile per call."""
    k = pl.program_id(1)
    nk = pl.num_programs(1)

    @pl.when(k == 0)
    def _init():
        m_sc[...] = jnp.full(m_sc.shape, -jnp.inf, dtype=m_sc.dtype)
        se_sc[...] = jnp.zeros(se_sc.shape, dtype=se_sc.dtype)
        ses_sc[...] = jnp.zeros(ses_sc.shape, dtype=ses_sc.dtype)

    x = x_ref[...].astype(jnp.float32)                       # (TB, TC), f32 math (v5e-safe)

    if col_masked:
        # Only reached when the last column tile is ragged (static condition).
        col = lax.broadcasted_iota(jnp.int32, x.shape, 1) + k * col_tile
        valid = col < n_cols
        x_for_max = jnp.where(valid, x, -jnp.inf)
    else:
        valid = None
        x_for_max = x

    m_old = m_sc[...]                                        # (TB, 1)
    m_blk = jnp.max(x_for_max, axis=-1, keepdims=True)       # (TB, 1)   XLU
    m_new = jnp.maximum(m_old, m_blk)

    s = x - m_new                                            # (TB, TC)  VPU
    e = jnp.exp(s)                                           # (TB, TC)  EUP
    es = e * s
    if col_masked:
        e = jnp.where(valid, e, 0.0)
        es = jnp.where(valid, es, 0.0)

    # Rescale running stats from the old max to the new max (narrow (TB,1) math):
    #   sum e_old*(x - m_new) = a*ses_old + a*d*se_old,  with a = exp(d), d = m_old - m_new.
    a = jnp.exp(m_old - m_new)
    d = jnp.where(m_old > -jnp.inf, m_old - m_new, 0.0)      # avoid (-inf)*0 -> nan at k == 0
    se_old = se_sc[...]
    ses_old = ses_sc[...]
    se_sc[...] = a * se_old + jnp.sum(e, axis=-1, keepdims=True)
    ses_sc[...] = a * (ses_old + d * se_old) + jnp.sum(es, axis=-1, keepdims=True)
    m_sc[...] = m_new

    @pl.when(k == nk - 1)
    def _finalize():
        se = se_sc[...]
        inv = pl.reciprocal(se, approx=True)                 # EUP (free slot)
        inv = inv * (2.0 - se * inv)                         # one Newton step -> ~full f32
        # Per-row negative entropy; rows beyond the true batch are clipped on writeback.
        o_ref[...] = ses_sc[...] * inv - jnp.log(se)


def _pick_tiles(B, C, in_itemsize):
    """Per-generation tile sizes + explicit VMEM limit.

    Per-grid-step footprint accounted:
      2x double-buffered input block        : 2 * TB * Cpad * itemsize
      ~3 f32 block-sized elementwise temps  : 3 * TB * Cpad * 4   (x-cast / s / e / e*s)
      2x (TB,1) output block (lane-padded)  : 2 * TB * 128 * 4
      3  (TB,1) f32 scratch rows            : 3 * TB * 128 * 4
    """
    try:
        phys = int(pltpu.get_tpu_info().vmem_capacity_bytes)   # v5e/v6e 128 MiB, v7x 64 MiB
    except Exception:
        phys = 64 << 20                                        # conservative fallback (v7x)
    vmem_limit = int(min(phys // 2, 64 << 20))                 # explicit scoped-VMEM request
    block_budget = (vmem_limit * 3) // 4                       # headroom for compiler scratch

    tc = C if C <= 1024 else 512                               # single block for moderate C,
    cpad = max(128, -(-tc // 128) * 128)                       # else a 512-lane reduction tile

    per_row_bytes = cpad * (2 * in_itemsize + 3 * 4) + 5 * 128 * 4
    tb = block_budget // per_row_bytes
    tb = int(max(8, min(tb, 2048)))
    tb = (tb // 8) * 8
    return tb, tc, vmem_limit


def hloss(x, *, tile_rows=None, tile_cols=None):
    """Mean over all rows of sum_c softmax(x)*log_softmax(x) along dim=1."""
    if x.ndim < 2:
        raise ValueError("HLoss expects at least 2 dims (softmax over dim=1)")
    if x.ndim > 2:
        # softmax over dim=1, mean over every other dim -> flatten those into rows.
        x2 = jnp.moveaxis(x, 1, -1).reshape(-1, x.shape[1])
    else:
        x2 = x

    B, C = x2.shape
    itemsize = x2.dtype.itemsize
    tb_auto, tc_auto, vmem_limit = _pick_tiles(B, C, itemsize)

    tb = tb_auto if tile_rows is None else max(8, (int(tile_rows) // 8) * 8)
    if tb >= B:
        tb = B                               # single full-extent row block (always legal)
    tc = tc_auto if tile_cols is None else max(128, (int(tile_cols) // 128) * 128)
    if tc >= C:
        tc = C                               # single full-extent column block (always legal)

    nb = pl.cdiv(B, tb)
    nc = pl.cdiv(C, tc)
    col_masked = (nc > 1) and (C % tc != 0)  # only then can a column tile hold garbage lanes

    kernel = functools.partial(_hloss_kernel, n_cols=C, col_tile=tc, col_masked=col_masked)

    per_row = pl.pallas_call(
        kernel,
        out_shape=jax.ShapeDtypeStruct((B, 1), jnp.float32),
        grid_spec=pltpu.PrefetchScalarGridSpec(
            num_scalar_prefetch=0,
            grid=(nb, nc),
            in_specs=[pl.BlockSpec((tb, tc), lambda i, k: (i, k))],
            out_specs=pl.BlockSpec((tb, 1), lambda i, k: (i, 0)),
            scratch_shapes=[pltpu.VMEM((tb, 1), jnp.float32)] * 3,
        ),
        compiler_params=pltpu.CompilerParams(
            dimension_semantics=("parallel", "arbitrary"),
            vmem_limit_bytes=vmem_limit,
        ),
        cost_estimate=pl.CostEstimate(
            flops=5 * B * C,
            transcendentals=B * C,
            bytes_accessed=B * C * itemsize + B * 4,
        ),
    )(x2)

    # Exact mean over the true batch size; reducing the tiny (B,1) array costs B*4 bytes.
    return jnp.sum(per_row) / jnp.float32(B)


def hloss_ref(x):
    # Pure-JAX reference matching the PyTorch module.
    p = jax.nn.softmax(x, axis=1)
    logp = jax.nn.log_softmax(x, axis=1)
    return jnp.mean(jnp.sum(p * logp, axis=1))


if __name__ == "__main__":
    key = jax.random.PRNGKey(0)
    k1, k2, k3 = jax.random.split(key, 3)

    # 1) Small 2-D logits (single block on both axes).
    x = jax.random.normal(k1, (64, 32), dtype=jnp.float32)
    out = jax.block_until_ready(hloss(x))
    ref = hloss_ref(x)
    assert jnp.allclose(out, ref, atol=1e-5, rtol=1e-5), (out, ref)

    # 2) Forced multi-tile path with ragged row and column tiles
    #    (exercises the online-softmax C axis, column masking, clipped rows).
    x2 = jax.random.normal(k2, (40, 300), dtype=jnp.float32)
    out2 = jax.block_until_ready(hloss(x2, tile_rows=16, tile_cols=128))
    ref2 = hloss_ref(x2)
    assert jnp.allclose(out2, ref2, atol=1e-5, rtol=1e-5), (out2, ref2)

    # 3) 4-D input: softmax over dim=1, mean over batch + spatial (wrapper plumbing).
    x3 = jax.random.normal(k3, (2, 4, 6, 5), dtype=jnp.float32)
    out3 = jax.block_until_ready(hloss(x3))
    ref3 = hloss_ref(x3)
    assert jnp.allclose(out3, ref3, atol=1e-5, rtol=1e-5), (out3, ref3)

    print("KERNEL_OK")
</pallas_src>

<mosaic_0001>
module attributes {stable_mosaic.version = 11 : i64} {
  func.func @_hloss_kernel(%arg0: i32, %arg1: i32, %arg2: memref<64x32xf32, #tpu.memory_space<vmem>>, %arg3: memref<64x1xf32, #tpu.memory_space<vmem>>, %arg4: memref<64x1xf32, #tpu.memory_space<vmem>>, %arg5: memref<64x1xf32, #tpu.memory_space<vmem>>, %arg6: memref<64x1xf32, #tpu.memory_space<vmem>>) attributes {dimension_semantics = [#tpu.dimension_semantics<parallel>, #tpu.dimension_semantics<arbitrary>], iteration_bounds = array<i64: 1, 1>, scalar_prefetch = 0 : i64, scratch_operands = 3 : i64, tpu.core_type = #tpu.core_type<tc>, window_params = [{transform_indices = @transform_0, window_bounds = array<i64: 64, 32>}, {transform_indices = @transform_1, window_bounds = array<i64: 64, 1>}]} {
    %c0_i32 = arith.constant 0 : i32
    %0 = arith.cmpi eq, %arg1, %c0_i32 : i32
    %1 = arith.extui %0 : i1 to i32
    %c0_i32_0 = arith.constant 0 : i32
    %2 = arith.cmpi ne, %1, %c0_i32_0 : i32
    scf.if %2 {
      %cst_20 = arith.constant 0xFF800000 : f32
      %37 = vector.broadcast %cst_20 : f32 to vector<64x1xf32>
      %c0_21 = arith.constant 0 : index
      %c0_22 = arith.constant 0 : index
      %38 = vector.load %arg4[%c0_21, %c0_22] : memref<64x1xf32, #tpu.memory_space<vmem>>, vector<64x1xf32>
      tpu.vector_store %arg4[%c0_21, %c0_22], %37 {strides = array<i32>} : memref<64x1xf32, #tpu.memory_space<vmem>>, vector<64x1xf32>,
      %cst_23 = arith.constant 0.000000e+00 : f32
      %39 = vector.broadcast %cst_23 : f32 to vector<64x1xf32>
      %c0_24 = arith.constant 0 : index
      %c0_25 = arith.constant 0 : index
      %40 = vector.load %arg5[%c0_24, %c0_25] : memref<64x1xf32, #tpu.memory_space<vmem>>, vector<64x1xf32>
      tpu.vector_store %arg5[%c0_24, %c0_25], %39 {strides = array<i32>} : memref<64x1xf32, #tpu.memory_space<vmem>>, vector<64x1xf32>,
      %cst_26 = arith.constant 0.000000e+00 : f32
      %41 = vector.broadcast %cst_26 : f32 to vector<64x1xf32>
      %c0_27 = arith.constant 0 : index
      %c0_28 = arith.constant 0 : index
      %42 = vector.load %arg6[%c0_27, %c0_28] : memref<64x1xf32, #tpu.memory_space<vmem>>, vector<64x1xf32>
      tpu.vector_store %arg6[%c0_27, %c0_28], %41 {strides = array<i32>} : memref<64x1xf32, #tpu.memory_space<vmem>>, vector<64x1xf32>,
    } else {
    }
    %c0 = arith.constant 0 : index
    %c0_1 = arith.constant 0 : index
    %3 = vector.load %arg2[%c0, %c0_1] : memref<64x32xf32, #tpu.memory_space<vmem>>, vector<64x32xf32>
    %c0_2 = arith.constant 0 : index
    %c0_3 = arith.constant 0 : index
    %4 = vector.load %arg4[%c0_2, %c0_3] : memref<64x1xf32, #tpu.memory_space<vmem>>, vector<64x1xf32>
    %cst = arith.constant dense<0xFF800000> : vector<64xf32>
    %5 = vector.multi_reduction <maximumf>, %3, %cst [1] : vector<64x32xf32> to vector<64xf32>
    %6 = vector.shape_cast %5 : vector<64xf32> to vector<64x1xf32>
    %7 = arith.maximumf %4, %6 : vector<64x1xf32>
    %8 = vector.broadcast %7 : vector<64x1xf32> to vector<64x32xf32>
    %9 = arith.subf %3, %8 : vector<64x32xf32>
    %10 = math.exp %9 : vector<64x32xf32>
    %11 = arith.mulf %10, %9 : vector<64x32xf32>
    %12 = arith.subf %4, %7 : vector<64x1xf32>
    %13 = math.exp %12 : vector<64x1xf32>
    %cst_4 = arith.constant 0xFF800000 : f32
    %14 = vector.broadcast %cst_4 : f32 to vector<64x1xf32>
    %15 = arith.cmpf ogt, %4, %14 : vector<64x1xf32>
    %16 = arith.subf %4, %7 : vector<64x1xf32>
    %cst_5 = arith.constant 0.000000e+00 : f32
    %17 = vector.broadcast %cst_5 : f32 to vector<64x1xf32>
    %18 = arith.select %15, %16, %17 : vector<64x1xi1>, vector<64x1xf32>
    %c0_6 = arith.constant 0 : index
    %c0_7 = arith.constant 0 : index
    %19 = vector.load %arg5[%c0_6, %c0_7] : memref<64x1xf32, #tpu.memory_space<vmem>>, vector<64x1xf32>
    %c0_8 = arith.constant 0 : index
    %c0_9 = arith.constant 0 : index
    %20 = vector.load %arg6[%c0_8, %c0_9] : memref<64x1xf32, #tpu.memory_space<vmem>>, vector<64x1xf32>
    %21 = arith.mulf %13, %19 : vector<64x1xf32>
    %cst_10 = arith.constant dense<0.000000e+00> : vector<64xf32>
    %22 = vector.multi_reduction <add>, %10, %cst_10 [1] : vector<64x32xf32> to vector<64xf32>
    %23 = vector.shape_cast %22 : vector<64xf32> to vector<64x1xf32>
    %24 = arith.addf %21, %23 : vector<64x1xf32>
    %c0_11 = arith.constant 0 : index
    %c0_12 = arith.constant 0 : index
    %25 = vector.load %arg5[%c0_11, %c0_12] : memref<64x1xf32, #tpu.memory_space<vmem>>, vector<64x1xf32>
    tpu.vector_store %arg5[%c0_11, %c0_12], %24 {strides = array<i32>} : memref<64x1xf32, #tpu.memory_space<vmem>>, vector<64x1xf32>,
    %26 = arith.mulf %18, %19 : vector<64x1xf32>
    %27 = arith.addf %20, %26 : vector<64x1xf32>
    %28 = arith.mulf %13, %27 : vector<64x1xf32>
    %cst_13 = arith.constant dense<0.000000e+00> : vector<64xf32>
    %29 = vector.multi_reduction <add>, %11, %cst_13 [1] : vector<64x32xf32> to vector<64xf32>
    %30 = vector.shape_cast %29 : vector<64xf32> to vector<64x1xf32>
    %31 = arith.addf %28, %30 : vector<64x1xf32>
    %c0_14 = arith.constant 0 : index
    %c0_15 = arith.constant 0 : index
    %32 = vector.load %arg6[%c0_14, %c0_15] : memref<64x1xf32, #tpu.memory_space<vmem>>, vector<64x1xf32>
    tpu.vector_store %arg6[%c0_14, %c0_15], %31 {strides = array<i32>} : memref<64x1xf32, #tpu.memory_space<vmem>>, vector<64x1xf32>,
    %c0_16 = arith.constant 0 : index
    %c0_17 = arith.constant 0 : index
    %33 = vector.load %arg4[%c0_16, %c0_17] : memref<64x1xf32, #tpu.memory_space<vmem>>, vector<64x1xf32>
    tpu.vector_store %arg4[%c0_16, %c0_17], %7 {strides = array<i32>} : memref<64x1xf32, #tpu.memory_space<vmem>>, vector<64x1xf32>,
    %c0_i32_18 = arith.constant 0 : i32
    %34 = arith.cmpi eq, %arg1, %c0_i32_18 : i32
    %35 = arith.extui %34 : i1 to i32
    %c0_i32_19 = arith.constant 0 : i32
    %36 = arith.cmpi ne, %35, %c0_i32_19 : i32
    scf.if %36 {
      %c0_20 = arith.constant 0 : index
      %c0_21 = arith.constant 0 : index
      %37 = vector.load %arg5[%c0_20, %c0_21] : memref<64x1xf32, #tpu.memory_space<vmem>>, vector<64x1xf32>
      %38 = tpu.reciprocal %37 {approx = true} : vector<64x1xf32> -> vector<64x1xf32>
      %39 = arith.mulf %37, %38 : vector<64x1xf32>
      %cst_22 = arith.constant 2.000000e+00 : f32
      %40 = vector.broadcast %cst_22 : f32 to vector<64x1xf32>
      %41 = arith.subf %40, %39 : vector<64x1xf32>
      %42 = arith.mulf %38, %41 : vector<64x1xf32>
      %c0_23 = arith.constant 0 : index
      %c0_24 = arith.constant 0 : index
      %43 = vector.load %arg6[%c0_23, %c0_24] : memref<64x1xf32, #tpu.memory_space<vmem>>, vector<64x1xf32>
      %44 = arith.mulf %43, %42 : vector<64x1xf32>
      %45 = math.log %37 : vector<64x1xf32>
      %46 = arith.subf %44, %45 : vector<64x1xf32>
      %c0_25 = arith.constant 0 : index
      %c0_26 = arith.constant 0 : index
      %47 = vector.load %arg3[%c0_25, %c0_26] : memref<64x1xf32, #tpu.memory_space<vmem>>, vector<64x1xf32>
      tpu.vector_store %arg3[%c0_25, %c0_26], %46 {strides = array<i32>} : memref<64x1xf32, #tpu.memory_space<vmem>>, vector<64x1xf32>,
    } else {
    }
    return
  }
  func.func @transform_0(%arg0: i32, %arg1: i32) -> (i32, i32) {
    %c0_i32 = arith.constant 0 : i32
    return %arg0, %arg1 : i32, i32
  }
  func.func @transform_1(%arg0: i32, %arg1: i32) -> (i32, i32) {
    %c0_i32 = arith.constant 0 : i32
    %c0_i32_0 = arith.constant 0 : i32
    return %arg0, %c0_i32 : i32, i32
  }
}

</mosaic_0001>

<llo_original>
// kernel: tpu_custom_call.1
$region0: #{tpu_custom_call.1}
  #allocation0 [shape = 'u32[]', space=smem, size = 0x4, offset = 0x4, fixed_abs, tag = 'smem constant byte address 0x4 - core index']
  #allocation1 [shape = 'u32[144,128]{1,0:T(1,128)}', space=vmem, size = 0x12000, scoped, tag = 'internal scratch']
  #allocation2 [shape = 'f32[64,1]{1,0:T(8,128)}', space=vmem, size = 0x8000, scoped, tag = 'scratch operand']
  #allocation3 [shape = 'f32[64,1]{1,0:T(8,128)}', space=vmem, size = 0x8000, scoped, tag = 'scratch operand']
  #allocation4 [shape = 'f32[64,1]{1,0:T(8,128)}', space=vmem, size = 0x8000, scoped, tag = 'scratch operand']
  %s0 = inlined_call_operand.vmem [shape: f32[64,32], index: 0, kind: input, shape index: {}]
  %s1 = inlined_call_operand.vmem [shape: f32[64,1], index: 1, kind: output, shape index: {}]
  %s2 = sld [smem:[#allocation0]]
  $region22: #{tpu_custom_call.1} parent=0
    _
  %s4 = ssub.s32 1, %s2
  %s5 = scalar_select 0, %s4, %s2
  // Predicated region
  $region2: #{tpu_custom_call.1} parent=0 // pred_check
    _
  $region3: #{tpu_custom_call.1} parent=0 // pred_check_branch
    %7 = sbr.rel (0) target = $region5
  $region4: #{tpu_custom_call.1} parent=0 // pred_region
    _
  $region5: #{tpu_custom_call.1} parent=0 // pred_fallthru
    _
  %p8 = scmp.eq.s32.totalorder 0, 0
  // Predicated region
  $region6: #{tpu_custom_call.1} parent=0 // pred_check
    %p9 = pneg %p8
  $region7: #{tpu_custom_call.1} parent=0 // pred_check_branch
    %11 = sbr.rel (%p9) target = $region9
  $region8: #{tpu_custom_call.1} parent=0 // pred_region
    %vm12 = vcmask 7168
    %13 = vst.msk [vmem:[#allocation2] sm:$0xff] %vm12, -inf
    %14 = vst.msk [vmem:[#allocation2 + $0x8] sm:$0xff] %vm12, -inf
    %15 = vst.msk [vmem:[#allocation2 + $0x10] sm:$0xff] %vm12, -inf
    %16 = vst.msk [vmem:[#allocation2 + $0x18] sm:$0xff] %vm12, -inf
    %17 = vst.msk [vmem:[#allocation2 + $0x20] sm:$0xff] %vm12, -inf
    %18 = vst.msk [vmem:[#allocation2 + $0x28] sm:$0xff] %vm12, -inf
    %19 = vst.msk [vmem:[#allocation2 + $0x30] sm:$0xff] %vm12, -inf
    %20 = vst.msk [vmem:[#allocation2 + $0x38] sm:$0xff] %vm12, -inf
    %21 = vst.msk [vmem:[#allocation3] sm:$0xff] %vm12, 0.0
    %22 = vst.msk [vmem:[#allocation3 + $0x8] sm:$0xff] %vm12, 0.0
    %23 = vst.msk [vmem:[#allocation3 + $0x10] sm:$0xff] %vm12, 0.0
    %24 = vst.msk [vmem:[#allocation3 + $0x18] sm:$0xff] %vm12, 0.0
    %25 = vst.msk [vmem:[#allocation3 + $0x20] sm:$0xff] %vm12, 0.0
    %26 = vst.msk [vmem:[#allocation3 + $0x28] sm:$0xff] %vm12, 0.0
    %27 = vst.msk [vmem:[#allocation3 + $0x30] sm:$0xff] %vm12, 0.0
    %28 = vst.msk [vmem:[#allocation3 + $0x38] sm:$0xff] %vm12, 0.0
    %29 = vst.msk [vmem:[#allocation4] sm:$0xff] %vm12, 0.0
    %30 = vst.msk [vmem:[#allocation4 + $0x8] sm:$0xff] %vm12, 0.0
    %31 = vst.msk [vmem:[#allocation4 + $0x10] sm:$0xff] %vm12, 0.0
    %32 = vst.msk [vmem:[#allocation4 + $0x18] sm:$0xff] %vm12, 0.0
    %33 = vst.msk [vmem:[#allocation4 + $0x20] sm:$0xff] %vm12, 0.0
    %34 = vst.msk [vmem:[#allocation4 + $0x28] sm:$0xff] %vm12, 0.0
    %35 = vst.msk [vmem:[#allocation4 + $0x30] sm:$0xff] %vm12, 0.0
    %36 = vst.msk [vmem:[#allocation4 + $0x38] sm:$0xff] %vm12, 0.0
  $region9: #{tpu_custom_call.1} parent=0 // pred_fallthru
    _
  %v37 = vld [vmem:[%s0] sm:$0xff]
  %v38 = vld [vmem:[%s0 + $0x8] sm:$0xff]
  %v39 = vld [vmem:[%s0 + $0x10] sm:$0xff]
  %v40 = vld [vmem:[%s0 + $0x18] sm:$0xff]
  %v41 = vld [vmem:[%s0 + $0x20] sm:$0xff]
  %v42 = vld [vmem:[%s0 + $0x28] sm:$0xff]
  %v43 = vld [vmem:[%s0 + $0x30] sm:$0xff]
  %v44 = vld [vmem:[%s0 + $0x38] sm:$0xff]
  %v45 = vld [vmem:[#allocation2] sm:$0xff]
  %v46 = vld [vmem:[#allocation2 + $0x8] sm:$0xff]
  %v47 = vld [vmem:[#allocation2 + $0x10] sm:$0xff]
  %v48 = vld [vmem:[#allocation2 + $0x18] sm:$0xff]
  %v49 = vld [vmem:[#allocation2 + $0x20] sm:$0xff]
  %v50 = vld [vmem:[#allocation2 + $0x28] sm:$0xff]
  %v51 = vld [vmem:[#allocation2 + $0x30] sm:$0xff]
  %v52 = vld [vmem:[#allocation2 + $0x38] sm:$0xff]
  %vm53 = vcmask 261120
  %v54 = vsel %vm53, %v37, -inf
  %55 = vmax.xlane.f32.xlu0 %v54
  %v56 = vpop.xlane.xlu0 %55
  %v57 = vsel %vm53, %v38, -inf
  %58 = vmax.xlane.f32.xlu0 %v57
  %v59 = vpop.xlane.xlu0 %58
  %v60 = vsel %vm53, %v39, -inf
  %61 = vmax.xlane.f32.xlu0 %v60
  %v62 = vpop.xlane.xlu0 %61
  %v63 = vsel %vm53, %v40, -inf
  %64 = vmax.xlane.f32.xlu0 %v63
  %v65 = vpop.xlane.xlu0 %64
  %v66 = vsel %vm53, %v41, -inf
  %67 = vmax.xlane.f32.xlu0 %v66
  %v68 = vpop.xlane.xlu0 %67
  %v69 = vsel %vm53, %v42, -inf
  %70 = vmax.xlane.f32.xlu0 %v69
  %v71 = vpop.xlane.xlu0 %70
  %v72 = vsel %vm53, %v43, -inf
  %73 = vmax.xlane.f32.xlu0 %v72
  %v74 = vpop.xlane.xlu0 %73
  %v75 = vsel %vm53, %v44, -inf
  %76 = vmax.xlane.f32.xlu0 %v75
  %v77 = vpop.xlane.xlu0 %76
  %v78 = vmax.f32 %v45, %v56
  %v79 = vmax.f32 %v46, %v59
  %v80 = vmax.f32 %v47, %v62
  %v81 = vmax.f32 %v48, %v65
  %v82 = vmax.f32 %v49, %v68
  %v83 = vmax.f32 %v50, %v71
  %v84 = vmax.f32 %v51, %v74
  %v85 = vmax.f32 %v52, %v77
  %87 = vset.pattern.permute.xlu0 0
  %88 = vperm.xlu0 %87, %v78
  %v89 = vpop.permute.xlu0 %88
  %92 = vset.pattern.permute.xlu0 0
  %93 = vperm.xlu0 %92, %v79
  %v94 = vpop.permute.xlu0 %93
  %97 = vset.pattern.permute.xlu0 0
  %98 = vperm.xlu0 %97, %v80
  %v99 = vpop.permute.xlu0 %98
  %102 = vset.pattern.permute.xlu0 0
  %103 = vperm.xlu0 %102, %v81
  %v104 = vpop.permute.xlu0 %103
  %107 = vset.pattern.permute.xlu0 0
  %108 = vperm.xlu0 %107, %v82
  %v109 = vpop.permute.xlu0 %108
  %112 = vset.pattern.permute.xlu0 0
  %113 = vperm.xlu0 %112, %v83
  %v114 = vpop.permute.xlu0 %113
  %117 = vset.pattern.permute.xlu0 0
  %118 = vperm.xlu0 %117, %v84
  %v119 = vpop.permute.xlu0 %118
  %122 = vset.pattern.permute.xlu0 0
  %123 = vperm.xlu0 %122, %v85
  %v124 = vpop.permute.xlu0 %123
  %v126 = vsub.f32 %v37, %v89
  %v127 = vsub.f32 %v38, %v94
  %v128 = vsub.f32 %v39, %v99
  %v129 = vsub.f32 %v40, %v104
  %v130 = vsub.f32 %v41, %v109
  %v131 = vsub.f32 %v42, %v114
  %v132 = vsub.f32 %v43, %v119
  %v133 = vsub.f32 %v44, %v124
  %v134 = vmul.f32 %v126, 1.442695
  %v135 = vpow.pop %v134
  %v136 = vmul.f32 %v127, 1.442695
  %v137 = vpow.pop %v136
  %v138 = vmul.f32 %v128, 1.442695
  %v139 = vpow.pop %v138
  %v140 = vmul.f32 %v129, 1.442695
  %v141 = vpow.pop %v140
  %v142 = vmul.f32 %v130, 1.442695
  %v143 = vpow.pop %v142
  %v144 = vmul.f32 %v131, 1.442695
  %v145 = vpow.pop %v144
  %v146 = vmul.f32 %v132, 1.442695
  %v147 = vpow.pop %v146
  %v148 = vmul.f32 %v133, 1.442695
  %v149 = vpow.pop %v148
  %v150 = vmul.f32 %v135, %v126
  %v151 = vmul.f32 %v137, %v127
  %v152 = vmul.f32 %v139, %v128
  %v153 = vmul.f32 %v141, %v129
  %v154 = vmul.f32 %v143, %v130
  %v155 = vmul.f32 %v145, %v131
  %v156 = vmul.f32 %v147, %v132
  %v157 = vmul.f32 %v149, %v133
  %v158 = vsub.f32 %v45, %v78
  %v159 = vsub.f32 %v46, %v79
  %v160 = vsub.f32 %v47, %v80
  %v161 = vsub.f32 %v48, %v81
  %v162 = vsub.f32 %v49, %v82
  %v163 = vsub.f32 %v50, %v83
  %v164 = vsub.f32 %v51, %v84
  %v165 = vsub.f32 %v52, %v85
  %v166 = vmul.f32 %v158, 1.442695
  %v167 = vpow.pop %v166
  %v168 = vmul.f32 %v159, 1.442695
  %v169 = vpow.pop %v168
  %v170 = vmul.f32 %v160, 1.442695
  %v171 = vpow.pop %v170
  %v172 = vmul.f32 %v161, 1.442695
  %v173 = vpow.pop %v172
  %v174 = vmul.f32 %v162, 1.442695
  %v175 = vpow.pop %v174
  %v176 = vmul.f32 %v163, 1.442695
  %v177 = vpow.pop %v176
  %v178 = vmul.f32 %v164, 1.442695
  %v179 = vpow.pop %v178
  %v180 = vmul.f32 %v165, 1.442695
  %v181 = vpow.pop %v180
  %vm182 = vcmp.gt.f32.partialorder %v45, -inf
  %vm183 = vcmp.gt.f32.partialorder %v46, -inf
  %vm184 = vcmp.gt.f32.partialorder %v47, -inf
  %vm185 = vcmp.gt.f32.partialorder %v48, -inf
  %vm186 = vcmp.gt.f32.partialorder %v49, -inf
  %vm187 = vcmp.gt.f32.partialorder %v50, -inf
  %vm188 = vcmp.gt.f32.partialorder %v51, -inf
  %vm189 = vcmp.gt.f32.partialorder %v52, -inf
  %v190 = vsel %vm182, %v158, 0.0
  %v191 = vsel %vm183, %v159, 0.0
  %v192 = vsel %vm184, %v160, 0.0
  %v193 = vsel %vm185, %v161, 0.0
  %v194 = vsel %vm186, %v162, 0.0
  %v195 = vsel %vm187, %v163, 0.0
  %v196 = vsel %vm188, %v164, 0.0
  %v197 = vsel %vm189, %v165, 0.0
  %v198 = vld [vmem:[#allocation3] sm:$0xff]
  %v199 = vld [vmem:[#allocation3 + $0x8] sm:$0xff]
  %v200 = vld [vmem:[#allocation3 + $0x10] sm:$0xff]
  %v201 = vld [vmem:[#allocation3 + $0x18] sm:$0xff]
  %v202 = vld [vmem:[#allocation3 + $0x20] sm:$0xff]
  %v203 = vld [vmem:[#allocation3 + $0x28] sm:$0xff]
  %v204 = vld [vmem:[#allocation3 + $0x30] sm:$0xff]
  %v205 = vld [vmem:[#allocation3 + $0x38] sm:$0xff]
  %v206 = vld [vmem:[#allocation4] sm:$0xff]
  %v207 = vld [vmem:[#allocation4 + $0x8] sm:$0xff]
  %v208 = vld [vmem:[#allocation4 + $0x10] sm:$0xff]
  %v209 = vld [vmem:[#allocation4 + $0x18] sm:$0xff]
  %v210 = vld [vmem:[#allocation4 + $0x20] sm:$0xff]
  %v211 = vld [vmem:[#allocation4 + $0x28] sm:$0xff]
  %v212 = vld [vmem:[#allocation4 + $0x30] sm:$0xff]
  %v213 = vld [vmem:[#allocation4 + $0x38] sm:$0xff]
  %v214 = vmul.f32 %v167, %v198
  %v215 = vmul.f32 %v169, %v199
  %v216 = vmul.f32 %v171, %v200
  %v217 = vmul.f32 %v173, %v201
  %v218 = vmul.f32 %v175, %v202
  %v219 = vmul.f32 %v177, %v203
  %v220 = vmul.f32 %v179, %v204
  %v221 = vmul.f32 %v181, %v205
  %v222 = vsel %vm53, %v135, 0.0
  %223 = vadd.xlane.f32.xlu0 %v222
  %v224 = vpop.xlane.xlu0 %223
  %v225 = vsel %vm53, %v137, 0.0
  %226 = vadd.xlane.f32.xlu0 %v225
  %v227 = vpop.xlane.xlu0 %226
  %v228 = vsel %vm53, %v139, 0.0
  %229 = vadd.xlane.f32.xlu0 %v228
  %v230 = vpop.xlane.xlu0 %229
  %v231 = vsel %vm53, %v141, 0.0
  %232 = vadd.xlane.f32.xlu0 %v231
  %v233 = vpop.xlane.xlu0 %232
  %v234 = vsel %vm53, %v143, 0.0
  %235 = vadd.xlane.f32.xlu0 %v234
  %v236 = vpop.xlane.xlu0 %235
  %v237 = vsel %vm53, %v145, 0.0
  %238 = vadd.xlane.f32.xlu0 %v237
  %v239 = vpop.xlane.xlu0 %238
  %v240 = vsel %vm53, %v147, 0.0
  %241 = vadd.xlane.f32.xlu0 %v240
  %v242 = vpop.xlane.xlu0 %241
  %v243 = vsel %vm53, %v149, 0.0
  %244 = vadd.xlane.f32.xlu0 %v243
  %v245 = vpop.xlane.xlu0 %244
  %v246 = vadd.f32 %v214, %v224
  %v247 = vadd.f32 %v215, %v227
  %v248 = vadd.f32 %v216, %v230
  %v249 = vadd.f32 %v217, %v233
  %v250 = vadd.f32 %v218, %v236
  %v251 = vadd.f32 %v219, %v239
  %v252 = vadd.f32 %v220, %v242
  %v253 = vadd.f32 %v221, %v245
  %vm254 = vcmask 7168
  %255 = vst.msk [vmem:[#allocation3] sm:$0xff] %vm254, %v246
  %256 = vst.msk [vmem:[#allocation3 + $0x8] sm:$0xff] %vm254, %v247
  %257 = vst.msk [vmem:[#allocation3 + $0x10] sm:$0xff] %vm254, %v248
  %258 = vst.msk [vmem:[#allocation3 + $0x18] sm:$0xff] %vm254, %v249
  %259 = vst.msk [vmem:[#allocation3 + $0x20] sm:$0xff] %vm254, %v250
  %260 = vst.msk [vmem:[#allocation3 + $0x28] sm:$0xff] %vm254, %v251
  %261 = vst.msk [vmem:[#allocation3 + $0x30] sm:$0xff] %vm254, %v252
  %262 = vst.msk [vmem:[#allocation3 + $0x38] sm:$0xff] %vm254, %v253
  %v263 = vmul.f32 %v190, %v198
  %v264 = vmul.f32 %v191, %v199
  %v265 = vmul.f32 %v192, %v200
  %v266 = vmul.f32 %v193, %v201
  %v267 = vmul.f32 %v194, %v202
  %v268 = vmul.f32 %v195, %v203
  %v269 = vmul.f32 %v196, %v204
  %v270 = vmul.f32 %v197, %v205
  %v271 = vadd.f32 %v206, %v263
  %v272 = vadd.f32 %v207, %v264
  %v273 = vadd.f32 %v208, %v265
  %v274 = vadd.f32 %v209, %v266
  %v275 = vadd.f32 %v210, %v267
  %v276 = vadd.f32 %v211, %v268
  %v277 = vadd.f32 %v212, %v269
  %v278 = vadd.f32 %v213, %v270
  %v279 = vmul.f32 %v167, %v271
  %v280 = vmul.f32 %v169, %v272
  %v281 = vmul.f32 %v171, %v273
  %v282 = vmul.f32 %v173, %v274
  %v283 = vmul.f32 %v175, %v275
  %v284 = vmul.f32 %v177, %v276
  %v285 = vmul.f32 %v179, %v277
  %v286 = vmul.f32 %v181, %v278
  %v287 = vsel %vm53, %v150, 0.0
  %288 = vadd.xlane.f32.xlu0 %v287
  %v289 = vpop.xlane.xlu0 %288
  %v290 = vsel %vm53, %v151, 0.0
  %291 = vadd.xlane.f32.xlu0 %v290
  %v292 = vpop.xlane.xlu0 %291
  %v293 = vsel %vm53, %v152, 0.0
  %294 = vadd.xlane.f32.xlu0 %v293
  %v295 = vpop.xlane.xlu0 %294
  %v296 = vsel %vm53, %v153, 0.0
  %297 = vadd.xlane.f32.xlu0 %v296
  %v298 = vpop.xlane.xlu0 %297
  %v299 = vsel %vm53, %v154, 0.0
  %300 = vadd.xlane.f32.xlu0 %v299
  %v301 = vpop.xlane.xlu0 %300
  %v302 = vsel %vm53, %v155, 0.0
  %303 = vadd.xlane.f32.xlu0 %v302
  %v304 = vpop.xlane.xlu0 %303
  %v305 = vsel %vm53, %v156, 0.0
  %306 = vadd.xlane.f32.xlu0 %v305
  %v307 = vpop.xlane.xlu0 %306
  %v308 = vsel %vm53, %v157, 0.0
  %309 = vadd.xlane.f32.xlu0 %v308
  %v310 = vpop.xlane.xlu0 %309
  %v311 = vadd.f32 %v279, %v289
  %v312 = vadd.f32 %v280, %v292
  %v313 = vadd.f32 %v281, %v295
  %v314 = vadd.f32 %v282, %v298
  %v315 = vadd.f32 %v283, %v301
  %v316 = vadd.f32 %v284, %v304
  %v317 = vadd.f32 %v285, %v307
  %v318 = vadd.f32 %v286, %v310
  %319 = vst.msk [vmem:[#allocation4] sm:$0xff] %vm254, %v311
  %320 = vst.msk [vmem:[#allocation4 + $0x8] sm:$0xff] %vm254, %v312
  %321 = vst.msk [vmem:[#allocation4 + $0x10] sm:$0xff] %vm254, %v313
  %322 = vst.msk [vmem:[#allocation4 + $0x18] sm:$0xff] %vm254, %v314
  %323 = vst.msk [vmem:[#allocation4 + $0x20] sm:$0xff] %vm254, %v315
  %324 = vst.msk [vmem:[#allocation4 + $0x28] sm:$0xff] %vm254, %v316
  %325 = vst.msk [vmem:[#allocation4 + $0x30] sm:$0xff] %vm254, %v317
  %326 = vst.msk [vmem:[#allocation4 + $0x38] sm:$0xff] %vm254, %v318
  %327 = vst.msk [vmem:[#allocation2] sm:$0xff] %vm254, %v78
  %328 = vst.msk [vmem:[#allocation2 + $0x8] sm:$0xff] %vm254, %v79
  %329 = vst.msk [vmem:[#allocation2 + $0x10] sm:$0xff] %vm254, %v80
  %330 = vst.msk [vmem:[#allocation2 + $0x18] sm:$0xff] %vm254, %v81
  %331 = vst.msk [vmem:[#allocation2 + $0x20] sm:$0xff] %vm254, %v82
  %332 = vst.msk [vmem:[#allocation2 + $0x28] sm:$0xff] %vm254, %v83
  %333 = vst.msk [vmem:[#allocation2 + $0x30] sm:$0xff] %vm254, %v84
  %334 = vst.msk [vmem:[#allocation2 + $0x38] sm:$0xff] %vm254, %v85
  // Predicated region
  $region10: #{tpu_custom_call.1} parent=0 // pred_check
    %p335 = pneg %p8
  $region11: #{tpu_custom_call.1} parent=0 // pred_check_branch
    %337 = sbr.rel (%p335) target = $region13
  $region12: #{tpu_custom_call.1} parent=0 // pred_region
    %v338 = vld [vmem:[#allocation3] sm:$0xff]
    %v339 = vld [vmem:[#allocation3 + $0x8] sm:$0xff]
    %v340 = vld [vmem:[#allocation3 + $0x10] sm:$0xff]
    %v341 = vld [vmem:[#allocation3 + $0x18] sm:$0xff]
    %v342 = vld [vmem:[#allocation3 + $0x20] sm:$0xff]
    %v343 = vld [vmem:[#allocation3 + $0x28] sm:$0xff]
    %v344 = vld [vmem:[#allocation3 + $0x30] sm:$0xff]
    %v345 = vld [vmem:[#allocation3 + $0x38] sm:$0xff]
    %v346 = vrcp.pop %v338
    %v347 = vrcp.pop %v339
    %v348 = vrcp.pop %v340
    %v349 = vrcp.pop %v341
    %v350 = vrcp.pop %v342
    %v351 = vrcp.pop %v343
    %v352 = vrcp.pop %v344
    %v353 = vrcp.pop %v345
    %v354 = vmul.f32 %v338, %v346
    %v355 = vmul.f32 %v339, %v347
    %v356 = vmul.f32 %v340, %v348
    %v357 = vmul.f32 %v341, %v349
    %v358 = vmul.f32 %v342, %v350
    %v359 = vmul.f32 %v343, %v351
    %v360 = vmul.f32 %v344, %v352
    %v361 = vmul.f32 %v345, %v353
    %v362 = vsub.f32 2.0, %v354
    %v363 = vsub.f32 2.0, %v355
    %v364 = vsub.f32 2.0, %v356
    %v365 = vsub.f32 2.0, %v357
    %v366 = vsub.f32 2.0, %v358
    %v367 = vsub.f32 2.0, %v359
    %v368 = vsub.f32 2.0, %v360
    %v369 = vsub.f32 2.0, %v361
    %v370 = vmul.f32 %v346, %v362
    %v371 = vmul.f32 %v347, %v363
    %v372 = vmul.f32 %v348, %v364
    %v373 = vmul.f32 %v349, %v365
    %v374 = vmul.f32 %v350, %v366
    %v375 = vmul.f32 %v351, %v367
    %v376 = vmul.f32 %v352, %v368
    %v377 = vmul.f32 %v353, %v369
    %v378 = vld [vmem:[#allocation4] sm:$0xff]
    %v379 = vld [vmem:[#allocation4 + $0x8] sm:$0xff]
    %v380 = vld [vmem:[#allocation4 + $0x10] sm:$0xff]
    %v381 = vld [vmem:[#allocation4 + $0x18] sm:$0xff]
    %v382 = vld [vmem:[#allocation4 + $0x20] sm:$0xff]
    %v383 = vld [vmem:[#allocation4 + $0x28] sm:$0xff]
    %v384 = vld [vmem:[#allocation4 + $0x30] sm:$0xff]
    %v385 = vld [vmem:[#allocation4 + $0x38] sm:$0xff]
    %v386 = vmul.f32 %v378, %v370
    %v387 = vmul.f32 %v379, %v371
    %v388 = vmul.f32 %v380, %v372
    %v389 = vmul.f32 %v381, %v373
    %v390 = vmul.f32 %v382, %v374
    %v391 = vmul.f32 %v383, %v375
    %v392 = vmul.f32 %v384, %v376
    %v393 = vmul.f32 %v385, %v377
    %v394 = vlog2.pop %v338
    %v395 = vmul.f32 %v394, 0.6931472
    %v396 = vlog2.pop %v339
    %v397 = vmul.f32 %v396, 0.6931472
    %v398 = vlog2.pop %v340
    %v399 = vmul.f32 %v398, 0.6931472
    %v400 = vlog2.pop %v341
    %v401 = vmul.f32 %v400, 0.6931472
    %v402 = vlog2.pop %v342
    %v403 = vmul.f32 %v402, 0.6931472
    %v404 = vlog2.pop %v343
    %v405 = vmul.f32 %v404, 0.6931472
    %v406 = vlog2.pop %v344
    %v407 = vmul.f32 %v406, 0.6931472
    %v408 = vlog2.pop %v345
    %v409 = vmul.f32 %v408, 0.6931472
    %v410 = vsub.f32 %v386, %v395
    %v411 = vsub.f32 %v387, %v397
    %v412 = vsub.f32 %v388, %v399
    %v413 = vsub.f32 %v389, %v401
    %v414 = vsub.f32 %v390, %v403
    %v415 = vsub.f32 %v391, %v405
    %v416 = vsub.f32 %v392, %v407
    %v417 = vsub.f32 %v393, %v409
    %418 = vst.msk [vmem:[%s1] sm:$0xff] %vm254, %v410
    %419 = vst.msk [vmem:[%s1 + $0x8] sm:$0xff] %vm254, %v411
    %420 = vst.msk [vmem:[%s1 + $0x10] sm:$0xff] %vm254, %v412
    %421 = vst.msk [vmem:[%s1 + $0x18] sm:$0xff] %vm254, %v413
    %422 = vst.msk [vmem:[%s1 + $0x20] sm:$0xff] %vm254, %v414
    %423 = vst.msk [vmem:[%s1 + $0x28] sm:$0xff] %vm254, %v415
    %424 = vst.msk [vmem:[%s1 + $0x30] sm:$0xff] %vm254, %v416
    %425 = vst.msk [vmem:[%s1 + $0x38] sm:$0xff] %vm254, %v417
  $region13: #{tpu_custom_call.1} parent=0 // pred_fallthru
    _
  // Predicated region
  $region14: #{tpu_custom_call.1} parent=0 // pred_check
    _
  $region15: #{tpu_custom_call.1} parent=0 // pred_check_branch
    %427 = sbr.rel (0) target = $region17
  $region16: #{tpu_custom_call.1} parent=0 // pred_region
    _
  $region17: #{tpu_custom_call.1} parent=0 // pred_fallthru
    _
  // Predicated region
  $region18: #{tpu_custom_call.1} parent=0 // pred_check
    _
  $region19: #{tpu_custom_call.1} parent=0 // pred_check_branch
    %429 = sbr.rel (0) target = $region21
  $region20: #{tpu_custom_call.1} parent=0 // pred_region
    _
  $region21: #{tpu_custom_call.1} parent=0 // pred_fallthru
    _

</llo_original>
